<compile_context>
chip_gen: v6e
topology: v6e:2x2x1
jax: 0.10.0
libtpu: 0.0.40
codegen_flags: <defaults>
</compile_context>

<pallas_src>
import functools
import math

import jax
import jax.numpy as jnp
from jax.experimental import pallas as pl
from jax.experimental.pallas import tpu as pltpu

ALPHA = 1.0
GAMMA = 2.0

_LANE = 1024            # lane-dense last dim (multiple of 128)
_MAX_BLOCK_ROWS = 512   # 512 * 1024 * 4 B = 2 MiB per f32 input tile


def _round_up(a, b):
    return (a + b - 1) // b * b


def _focal_loss_kernel(x_ref, t_ref, out_ref, *, alpha, gamma, block_rows, lane,
                       total, needs_mask):
    i = pl.program_id(0)

    x = x_ref[...].astype(jnp.float32)
    t = t_ref[...].astype(jnp.float32)

    # Numerically-stable BCE with logits (== torch.F.binary_cross_entropy_with_logits,
    # reduction='none'):  bce = max(x, 0) - x*t + log(1 + exp(-|x|))
    bce = jnp.maximum(x, 0.0) - x * t + jnp.log1p(jnp.exp(-jnp.abs(x)))

    pt = jnp.exp(-bce)
    one_minus_pt = jnp.maximum(1.0 - pt, 0.0)   # clamp: pt can round slightly above 1

    g = float(gamma)
    if g == 2.0:                                # default path: VPU multiply, no pow
        mod = one_minus_pt * one_minus_pt
    elif g == 1.0:
        mod = one_minus_pt
    elif g == 0.0:
        mod = jnp.ones_like(one_minus_pt)
    else:
        mod = one_minus_pt ** jnp.float32(g)    # general (EUP pow), base clamped >= 0

    focal = mod * bce
    if float(alpha) != 1.0:
        focal = jnp.float32(alpha) * focal

    if needs_mask:
        # mask out zero-padded tail elements (padding only exists when the flattened
        # size is not a multiple of block_rows * lane).
        # TODO(synk): flat index is int32; shapes with >= 2**31 elements would overflow.
        rows = jax.lax.broadcasted_iota(jnp.int32, (block_rows, lane), 0)
        cols = jax.lax.broadcasted_iota(jnp.int32, (block_rows, lane), 1)
        flat = (i * block_rows + rows) * lane + cols
        focal = jnp.where(flat < total, focal, 0.0)

    # Independent per-block partial sum -> no loop-carried accumulator, grid axis can
    # be 'parallel' (lets both v7x TensorCores stream HBM concurrently).
    s = jnp.sum(focal)
    out_ref[...] = jnp.broadcast_to(s, (1, 8, 128))


def focal_loss(inputs, targets, alpha=ALPHA, gamma=GAMMA, reduction="mean"):
    """Pallas TPU focal loss.  inputs/targets: same-shape float arrays (any rank).

    Matches the PyTorch module: returns mean if reduction == 'mean', else sum.
    """
    assert inputs.shape == targets.shape, "inputs/targets must have the same shape"

    total = int(math.prod(inputs.shape))
    lane = _LANE
    rows = max(1, -(-total // lane))                       # ceil
    block_rows = min(_MAX_BLOCK_ROWS, _round_up(rows, 8))  # sublane multiple of 8
    rows_pad = _round_up(rows, block_rows)
    grid = rows_pad // block_rows
    pad = rows_pad * lane - total

    # Flatten (keep caller dtype, e.g. bf16 - upcast happens inside the kernel so
    # HBM traffic stays at the input precision), zero-pad, lane-dense reshape.
    x = jnp.ravel(inputs)
    t = jnp.ravel(targets)
    if pad:
        x = jnp.pad(x, (0, pad))
        t = jnp.pad(t, (0, pad))
    x = x.reshape(rows_pad, lane)
    t = t.reshape(rows_pad, lane)

    kernel = functools.partial(
        _focal_loss_kernel,
        alpha=float(alpha), gamma=float(gamma),
        block_rows=block_rows, lane=lane,
        total=total, needs_mask=(pad != 0))

    partials = pl.pallas_call(
        kernel,
        out_shape=jax.ShapeDtypeStruct((grid, 8, 128), jnp.float32),
        grid_spec=pltpu.PrefetchScalarGridSpec(
            num_scalar_prefetch=0,
            grid=(grid,),
            in_specs=[
                pl.BlockSpec((block_rows, lane), lambda i: (i, 0)),
                pl.BlockSpec((block_rows, lane), lambda i: (i, 0)),
            ],
            out_specs=pl.BlockSpec((1, 8, 128), lambda i: (i, 0, 0)),
        ),
        compiler_params=pltpu.CompilerParams(
            dimension_semantics=("parallel",),          # independent blocks -> 2 TCs on v7x
            vmem_limit_bytes=32 * 1024 * 1024),         # safe on v5e/v6e/v7x, >> working set
    )(x, t)

    loss_sum = jnp.sum(partials[:, 0, 0])
    if reduction == "mean":
        return loss_sum / jnp.float32(total)
    return loss_sum  # matches PyTorch module: anything else -> sum


def _focal_loss_ref(inputs, targets, alpha=ALPHA, gamma=GAMMA, reduction="mean"):
    x = inputs.astype(jnp.float32)
    t = targets.astype(jnp.float32)
    bce = jnp.maximum(x, 0.0) - x * t + jnp.log1p(jnp.exp(-jnp.abs(x)))
    pt = jnp.exp(-bce)
    focal = alpha * (1.0 - pt) ** gamma * bce
    return jnp.mean(focal) if reduction == "mean" else jnp.sum(focal)


if __name__ == "__main__":
    key = jax.random.PRNGKey(0)
    k1, k2, k3, k4 = jax.random.split(key, 4)

    # classification-head-like shape: (batch*..., num_classes)
    N, C = 16, 256
    logits = jax.random.normal(k1, (N, C), dtype=jnp.float32) * 2.0
    targets = (jax.random.uniform(k2, (N, C)) > 0.5).astype(jnp.float32)

    out = jax.block_until_ready(focal_loss(logits, targets))
    ref = _focal_loss_ref(logits, targets)
    assert jnp.allclose(out, ref, rtol=1e-5, atol=1e-6), (out, ref)

    # 'sum' reduction path
    out_s = jax.block_until_ready(focal_loss(logits, targets, reduction="sum"))
    ref_s = _focal_loss_ref(logits, targets, reduction="sum")
    assert jnp.allclose(out_s, ref_s, rtol=1e-5, atol=1e-4), (out_s, ref_s)

    # odd, non-128-aligned shape -> exercises padding + in-kernel mask
    logits2 = jax.random.normal(k3, (7, 33), dtype=jnp.float32)
    targets2 = (jax.random.uniform(k4, (7, 33)) > 0.5).astype(jnp.float32)
    out2 = jax.block_until_ready(focal_loss(logits2, targets2))
    ref2 = _focal_loss_ref(logits2, targets2)
    assert jnp.allclose(out2, ref2, rtol=1e-5, atol=1e-6), (out2, ref2)

    print("KERNEL_OK")
</pallas_src>

<mosaic_0001>
module attributes {stable_mosaic.version = 11 : i64} {
  func.func @_focal_loss_kernel(%arg0: i32, %arg1: memref<8x1024xf32, #tpu.memory_space<vmem>>, %arg2: memref<8x1024xf32, #tpu.memory_space<vmem>>, %arg3: memref<1x8x128xf32, #tpu.memory_space<vmem>>) attributes {dimension_semantics = [#tpu.dimension_semantics<parallel>], iteration_bounds = array<i64: 1>, scalar_prefetch = 0 : i64, scratch_operands = 0 : i64, tpu.core_type = #tpu.core_type<tc>, window_params = [{transform_indices = @transform_0, window_bounds = array<i64: 8, 1024>}, {transform_indices = @transform_1, window_bounds = array<i64: 8, 1024>}, {transform_indices = @transform_2, window_bounds = array<i64: 1, 8, 128>}]} {
    %c0 = arith.constant 0 : index
    %c0_0 = arith.constant 0 : index
    %0 = vector.load %arg1[%c0, %c0_0] : memref<8x1024xf32, #tpu.memory_space<vmem>>, vector<8x1024xf32>
    %c0_1 = arith.constant 0 : index
    %c0_2 = arith.constant 0 : index
    %1 = vector.load %arg2[%c0_1, %c0_2] : memref<8x1024xf32, #tpu.memory_space<vmem>>, vector<8x1024xf32>
    %cst = arith.constant 0.000000e+00 : f32
    %2 = vector.broadcast %cst : f32 to vector<8x1024xf32>
    %3 = arith.maximumf %0, %2 : vector<8x1024xf32>
    %4 = arith.mulf %0, %1 : vector<8x1024xf32>
    %5 = arith.subf %3, %4 : vector<8x1024xf32>
    %6 = math.absf %0 : vector<8x1024xf32>
    %cst_3 = arith.constant 0.000000e+00 : f32
    %7 = vector.broadcast %cst_3 : f32 to vector<8x1024xf32>
    %8 = arith.subf %7, %6 : vector<8x1024xf32>
    %9 = math.exp %8 : vector<8x1024xf32>
    %10 = math.log1p %9 : vector<8x1024xf32>
    %11 = arith.addf %5, %10 : vector<8x1024xf32>
    %cst_4 = arith.constant 0.000000e+00 : f32
    %12 = vector.broadcast %cst_4 : f32 to vector<8x1024xf32>
    %13 = arith.subf %12, %11 : vector<8x1024xf32>
    %14 = math.exp %13 : vector<8x1024xf32>
    %cst_5 = arith.constant 1.000000e+00 : f32
    %15 = vector.broadcast %cst_5 : f32 to vector<8x1024xf32>
    %16 = arith.subf %15, %14 : vector<8x1024xf32>
    %cst_6 = arith.constant 0.000000e+00 : f32
    %17 = vector.broadcast %cst_6 : f32 to vector<8x1024xf32>
    %18 = arith.maximumf %16, %17 : vector<8x1024xf32>
    %19 = arith.mulf %18, %18 : vector<8x1024xf32>
    %20 = arith.mulf %19, %11 : vector<8x1024xf32>
    %21 = tpu.iota {dimensions = array<i32: 0>} : vector<8x1024xi32>
    %22 = tpu.iota {dimensions = array<i32: 1>} : vector<8x1024xi32>
    %c8_i32 = arith.constant 8 : i32
    %23 = arith.muli %arg0, %c8_i32 : i32
    %24 = vector.broadcast %23 : i32 to vector<8x1024xi32>
    %25 = arith.addi %24, %21 : vector<8x1024xi32>
    %c1024_i32 = arith.constant 1024 : i32
    %26 = vector.broadcast %c1024_i32 : i32 to vector<8x1024xi32>
    %27 = arith.muli %25, %26 : vector<8x1024xi32>
    %28 = arith.addi %27, %22 : vector<8x1024xi32>
    %c4096_i32 = arith.constant 4096 : i32
    %29 = vector.broadcast %c4096_i32 : i32 to vector<8x1024xi32>
    %30 = arith.cmpi slt, %28, %29 : vector<8x1024xi32>
    %cst_7 = arith.constant 0.000000e+00 : f32
    %31 = vector.broadcast %cst_7 : f32 to vector<8x1024xf32>
    %32 = arith.select %30, %20, %31 : vector<8x1024xi1>, vector<8x1024xf32>
    %33 = vector.shape_cast %32 : vector<8x1024xf32> to vector<1x8x1024xf32>
    %cst_8 = arith.constant dense<0.000000e+00> : vector<1xf32>
    %34 = vector.multi_reduction <add>, %33, %cst_8 [1, 2] : vector<1x8x1024xf32> to vector<1xf32>
    %35 = vector.shape_cast %34 : vector<1xf32> to vector<1x1x1xf32>
    %36 = vector.extract %35[0, 0, 0] : f32 from vector<1x1x1xf32>
    %37 = vector.broadcast %36 : f32 to vector<1x8x128xf32>
    %c0_9 = arith.constant 0 : index
    %c0_10 = arith.constant 0 : index
    %c0_11 = arith.constant 0 : index
    %38 = vector.load %arg3[%c0_9, %c0_10, %c0_11] : memref<1x8x128xf32, #tpu.memory_space<vmem>>, vector<1x8x128xf32>
    tpu.vector_store %arg3[%c0_9, %c0_10, %c0_11], %37 {strides = array<i32>} : memref<1x8x128xf32, #tpu.memory_space<vmem>>, vector<1x8x128xf32>,
    return
  }
  func.func @transform_0(%arg0: i32) -> (i32, i32) {
    %c0_i32 = arith.constant 0 : i32
    %c0_i32_0 = arith.constant 0 : i32
    return %arg0, %c0_i32 : i32, i32
  }
  func.func @transform_1(%arg0: i32) -> (i32, i32) {
    %c0_i32 = arith.constant 0 : i32
    %c0_i32_0 = arith.constant 0 : i32
    return %arg0, %c0_i32 : i32, i32
  }
  func.func @transform_2(%arg0: i32) -> (i32, i32, i32) {
    %c0_i32 = arith.constant 0 : i32
    %c0_i32_0 = arith.constant 0 : i32
    %c0_i32_1 = arith.constant 0 : i32
    return %arg0, %c0_i32, %c0_i32_0 : i32, i32, i32
  }
}

</mosaic_0001>

<llo_original>
// kernel: tpu_custom_call.1
$region0: #{tpu_custom_call.1}
  #allocation0 [shape = 'u32[]', space=smem, size = 0x4, offset = 0x4, fixed_abs, tag = 'smem constant byte address 0x4 - core index']
  #allocation1 [shape = 'u32[144,128]{1,0:T(1,128)}', space=vmem, size = 0x12000, scoped, tag = 'internal scratch']
  %s0 = inlined_call_operand.hbm [shape: f32[8,1024], index: 0, kind: input, shape index: {}]
  %s1 = inlined_call_operand.hbm [shape: f32[8,1024], index: 1, kind: input, shape index: {}]
  %s2 = inlined_call_operand.hbm [shape: f32[1,8,128], index: 2, kind: output, shape index: {}]
  %s3 = sld [smem:[#allocation0]]
  $region26: #{tpu_custom_call.1} parent=0
    _
  %s5 = ssub.s32 1, %s3
  %s6 = scalar_select 0, %s5, %s3
  $region1: #{tpu_custom_call.1} parent=0
    #allocation2 [shape = 'u8[32768]{0}', space=vmem, size = 0x8000, scoped, tag = 'input window, operand 0, single buffered']
    #allocation3 [shape = 's32[1]{0}', space=sflag, size = 0x4, scoped, tag = 'scoped memory for tpu_custom_call.1']
    #allocation4 [shape = 's32[1]{0}', space=sflag, size = 0x4, scoped, tag = 'scoped memory for tpu_custom_call.1']
    #allocation5 [shape = 'u8[32768]{0}', space=vmem, size = 0x8000, scoped, tag = 'input window, operand 1, single buffered']
    #allocation6 [shape = 's32[1]{0}', space=sflag, size = 0x4, scoped, tag = 'scoped memory for tpu_custom_call.1']
    #allocation7 [shape = 'u8[4096]{0}', space=vmem, size = 0x1000, scoped, tag = 'output window, operand 0, single buffered']
    %7 = vsyncpa [#allocation3], 0
    %8 = vsyncpa [#allocation6], 0
    %9 = vsyncpa [#allocation4], 0
    // Predicated region
    $region2: #{tpu_custom_call.1} parent=1 // pred_check
      _
    $region3: #{tpu_custom_call.1} parent=1 // pred_check_branch
      %11 = sbr.rel (0) target = $region5
    $region4: #{tpu_custom_call.1} parent=1 // pred_region
      %s13 = ssub.s32 1024, 1024
      %14 = vsyncadd [#allocation3], %s13
      %s16 = sshll.u32 [#allocation2], 4
      %s17 = int_to_ptr.vmem [resolvable:$true] %s16
      %19 = dma.hbm_to_vmem [thread:$0]  %s0, 1024, %s17, [#allocation3]
    $region5: #{tpu_custom_call.1} parent=1 // pred_fallthru
      _
    // Predicated region
    $region6: #{tpu_custom_call.1} parent=1 // pred_check
      _
    $region7: #{tpu_custom_call.1} parent=1 // pred_check_branch
      %21 = sbr.rel (0) target = $region9
    $region8: #{tpu_custom_call.1} parent=1 // pred_region
      %s23 = ssub.s32 1024, 1024
      %24 = vsyncadd [#allocation6], %s23
      %s26 = sshll.u32 [#allocation5], 4
      %s27 = int_to_ptr.vmem [resolvable:$true] %s26
      %29 = dma.hbm_to_vmem [thread:$0]  %s1, 1024, %s27, [#allocation6]
    $region9: #{tpu_custom_call.1} parent=1 // pred_fallthru
      _
    // Predicated region
    $region10: #{tpu_custom_call.1} parent=1 // pred_check
      _
    $region11: #{tpu_custom_call.1} parent=1 // pred_check_branch
      %31 = sbr.rel (0) target = $region13
    $region12: #{tpu_custom_call.1} parent=1 // pred_region
      %32 = dma.done [#allocation3], 1024
    $region13: #{tpu_custom_call.1} parent=1 // pred_fallthru
      _
    // Predicated region
    $region14: #{tpu_custom_call.1} parent=1 // pred_check
      _
    $region15: #{tpu_custom_call.1} parent=1 // pred_check_branch
      %34 = sbr.rel (0) target = $region17
    $region16: #{tpu_custom_call.1} parent=1 // pred_region
      %35 = dma.done [#allocation6], 1024
    $region17: #{tpu_custom_call.1} parent=1 // pred_fallthru
      _
    %v36 = vld [vmem:[#allocation2] sm:$0xff]
    %v37 = vld [vmem:[#allocation2 + $0x8] sm:$0xff]
    %v38 = vld [vmem:[#allocation2 + $0x10] sm:$0xff]
    %v39 = vld [vmem:[#allocation2 + $0x18] sm:$0xff]
    %v40 = vld [vmem:[#allocation2 + $0x20] sm:$0xff]
    %v41 = vld [vmem:[#allocation2 + $0x28] sm:$0xff]
    %v42 = vld [vmem:[#allocation2 + $0x30] sm:$0xff]
    %v43 = vld [vmem:[#allocation2 + $0x38] sm:$0xff]
    %v44 = vld [vmem:[#allocation5] sm:$0xff]
    %v45 = vld [vmem:[#allocation5 + $0x8] sm:$0xff]
    %v46 = vld [vmem:[#allocation5 + $0x10] sm:$0xff]
    %v47 = vld [vmem:[#allocation5 + $0x18] sm:$0xff]
    %v48 = vld [vmem:[#allocation5 + $0x20] sm:$0xff]
    %v49 = vld [vmem:[#allocation5 + $0x28] sm:$0xff]
    %v50 = vld [vmem:[#allocation5 + $0x30] sm:$0xff]
    %v51 = vld [vmem:[#allocation5 + $0x38] sm:$0xff]
    %v52 = vmax.f32 %v36, 0.0
    %v53 = vmax.f32 %v37, 0.0
    %v54 = vmax.f32 %v38, 0.0
    %v55 = vmax.f32 %v39, 0.0
    %v56 = vmax.f32 %v40, 0.0
    %v57 = vmax.f32 %v41, 0.0
    %v58 = vmax.f32 %v42, 0.0
    %v59 = vmax.f32 %v43, 0.0
    %v60 = vmul.f32 %v36, %v44
    %v61 = vmul.f32 %v37, %v45
    %v62 = vmul.f32 %v38, %v46
    %v63 = vmul.f32 %v39, %v47
    %v64 = vmul.f32 %v40, %v48
    %v65 = vmul.f32 %v41, %v49
    %v66 = vmul.f32 %v42, %v50
    %v67 = vmul.f32 %v43, %v51
    %v68 = vsub.f32 %v52, %v60
    %v69 = vsub.f32 %v53, %v61
    %v70 = vsub.f32 %v54, %v62
    %v71 = vsub.f32 %v55, %v63
    %v72 = vsub.f32 %v56, %v64
    %v73 = vsub.f32 %v57, %v65
    %v74 = vsub.f32 %v58, %v66
    %v75 = vsub.f32 %v59, %v67
    %v76 = vand.u32 2147483647, %v36
    %v77 = vand.u32 2147483647, %v37
    %v78 = vand.u32 2147483647, %v38
    %v79 = vand.u32 2147483647, %v39
    %v80 = vand.u32 2147483647, %v40
    %v81 = vand.u32 2147483647, %v41
    %v82 = vand.u32 2147483647, %v42
    %v83 = vand.u32 2147483647, %v43
    %v84 = vsub.f32 0.0, %v76
    %v85 = vsub.f32 0.0, %v77
    %v86 = vsub.f32 0.0, %v78
    %v87 = vsub.f32 0.0, %v79
    %v88 = vsub.f32 0.0, %v80
    %v89 = vsub.f32 0.0, %v81
    %v90 = vsub.f32 0.0, %v82
    %v91 = vsub.f32 0.0, %v83
    %v92 = vmul.f32 %v84, 1.442695
    %v93 = vpow.pop %v92
    %v94 = vmul.f32 %v85, 1.442695
    %v95 = vpow.pop %v94
    %v96 = vmul.f32 %v86, 1.442695
    %v97 = vpow.pop %v96
    %v98 = vmul.f32 %v87, 1.442695
    %v99 = vpow.pop %v98
    %v100 = vmul.f32 %v88, 1.442695
    %v101 = vpow.pop %v100
    %v102 = vmul.f32 %v89, 1.442695
    %v103 = vpow.pop %v102
    %v104 = vmul.f32 %v90, 1.442695
    %v105 = vpow.pop %v104
    %v106 = vmul.f32 %v91, 1.442695
    %v107 = vpow.pop %v106
    %v108 = vadd.f32 %v93, 1.0
    %v109 = vlog2.pop %v108
    %v110 = vmul.f32 %v109, 0.6931472
    %v111 = vmul.f32 -0.5, %v93
    %v112 = vadd.f32 %v111, 1.0
    %v113 = vmul.f32 %v112, %v93
    %v114 = vand.u32 2147483647, %v93
    %vm115 = vcmp.lt.f32.partialorder %v114, 0.0004427343
    %v116 = vsel %vm115, %v113, %v110
    %v117 = vadd.f32 %v95, 1.0
    %v118 = vlog2.pop %v117
    %v119 = vmul.f32 %v118, 0.6931472
    %v120 = vmul.f32 -0.5, %v95
    %v121 = vadd.f32 %v120, 1.0
    %v122 = vmul.f32 %v121, %v95
    %v123 = vand.u32 2147483647, %v95
    %vm124 = vcmp.lt.f32.partialorder %v123, 0.0004427343
    %v125 = vsel %vm124, %v122, %v119
    %v126 = vadd.f32 %v97, 1.0
    %v127 = vlog2.pop %v126
    %v128 = vmul.f32 %v127, 0.6931472
    %v129 = vmul.f32 -0.5, %v97
    %v130 = vadd.f32 %v129, 1.0
    %v131 = vmul.f32 %v130, %v97
    %v132 = vand.u32 2147483647, %v97
    %vm133 = vcmp.lt.f32.partialorder %v132, 0.0004427343
    %v134 = vsel %vm133, %v131, %v128
    %v135 = vadd.f32 %v99, 1.0
    %v136 = vlog2.pop %v135
    %v137 = vmul.f32 %v136, 0.6931472
    %v138 = vmul.f32 -0.5, %v99
    %v139 = vadd.f32 %v138, 1.0
    %v140 = vmul.f32 %v139, %v99
    %v141 = vand.u32 2147483647, %v99
    %vm142 = vcmp.lt.f32.partialorder %v141, 0.0004427343
    %v143 = vsel %vm142, %v140, %v137
    %v144 = vadd.f32 %v101, 1.0
    %v145 = vlog2.pop %v144
    %v146 = vmul.f32 %v145, 0.6931472
    %v147 = vmul.f32 -0.5, %v101
    %v148 = vadd.f32 %v147, 1.0
    %v149 = vmul.f32 %v148, %v101
    %v150 = vand.u32 2147483647, %v101
    %vm151 = vcmp.lt.f32.partialorder %v150, 0.0004427343
    %v152 = vsel %vm151, %v149, %v146
    %v153 = vadd.f32 %v103, 1.0
    %v154 = vlog2.pop %v153
    %v155 = vmul.f32 %v154, 0.6931472
    %v156 = vmul.f32 -0.5, %v103
    %v157 = vadd.f32 %v156, 1.0
    %v158 = vmul.f32 %v157, %v103
    %v159 = vand.u32 2147483647, %v103
    %vm160 = vcmp.lt.f32.partialorder %v159, 0.0004427343
    %v161 = vsel %vm160, %v158, %v155
    %v162 = vadd.f32 %v105, 1.0
    %v163 = vlog2.pop %v162
    %v164 = vmul.f32 %v163, 0.6931472
    %v165 = vmul.f32 -0.5, %v105
    %v166 = vadd.f32 %v165, 1.0
    %v167 = vmul.f32 %v166, %v105
    %v168 = vand.u32 2147483647, %v105
    %vm169 = vcmp.lt.f32.partialorder %v168, 0.0004427343
    %v170 = vsel %vm169, %v167, %v164
    %v171 = vadd.f32 %v107, 1.0
    %v172 = vlog2.pop %v171
    %v173 = vmul.f32 %v172, 0.6931472
    %v174 = vmul.f32 -0.5, %v107
    %v175 = vadd.f32 %v174, 1.0
    %v176 = vmul.f32 %v175, %v107
    %v177 = vand.u32 2147483647, %v107
    %vm178 = vcmp.lt.f32.partialorder %v177, 0.0004427343
    %v179 = vsel %vm178, %v176, %v173
    %v180 = vadd.f32 %v68, %v116
    %v181 = vadd.f32 %v69, %v125
    %v182 = vadd.f32 %v70, %v134
    %v183 = vadd.f32 %v71, %v143
    %v184 = vadd.f32 %v72, %v152
    %v185 = vadd.f32 %v73, %v161
    %v186 = vadd.f32 %v74, %v170
    %v187 = vadd.f32 %v75, %v179
    %v188 = vsub.f32 0.0, %v180
    %v189 = vsub.f32 0.0, %v181
    %v190 = vsub.f32 0.0, %v182
    %v191 = vsub.f32 0.0, %v183
    %v192 = vsub.f32 0.0, %v184
    %v193 = vsub.f32 0.0, %v185
    %v194 = vsub.f32 0.0, %v186
    %v195 = vsub.f32 0.0, %v187
    %v196 = vmul.f32 %v188, 1.442695
    %v197 = vpow.pop %v196
    %v198 = vmul.f32 %v189, 1.442695
    %v199 = vpow.pop %v198
    %v200 = vmul.f32 %v190, 1.442695
    %v201 = vpow.pop %v200
    %v202 = vmul.f32 %v191, 1.442695
    %v203 = vpow.pop %v202
    %v204 = vmul.f32 %v192, 1.442695
    %v205 = vpow.pop %v204
    %v206 = vmul.f32 %v193, 1.442695
    %v207 = vpow.pop %v206
    %v208 = vmul.f32 %v194, 1.442695
    %v209 = vpow.pop %v208
    %v210 = vmul.f32 %v195, 1.442695
    %v211 = vpow.pop %v210
    %v212 = vsub.f32 1.0, %v197
    %v213 = vsub.f32 1.0, %v199
    %v214 = vsub.f32 1.0, %v201
    %v215 = vsub.f32 1.0, %v203
    %v216 = vsub.f32 1.0, %v205
    %v217 = vsub.f32 1.0, %v207
    %v218 = vsub.f32 1.0, %v209
    %v219 = vsub.f32 1.0, %v211
    %v220 = vmax.f32 %v212, 0.0
    %v221 = vmax.f32 %v213, 0.0
    %v222 = vmax.f32 %v214, 0.0
    %v223 = vmax.f32 %v215, 0.0
    %v224 = vmax.f32 %v216, 0.0
    %v225 = vmax.f32 %v217, 0.0
    %v226 = vmax.f32 %v218, 0.0
    %v227 = vmax.f32 %v219, 0.0
    %v228 = vmul.f32 %v220, %v220
    %v229 = vmul.f32 %v221, %v221
    %v230 = vmul.f32 %v222, %v222
    %v231 = vmul.f32 %v223, %v223
    %v232 = vmul.f32 %v224, %v224
    %v233 = vmul.f32 %v225, %v225
    %v234 = vmul.f32 %v226, %v226
    %v235 = vmul.f32 %v227, %v227
    %v236 = vmul.f32 %v228, %v180
    %v237 = vmul.f32 %v229, %v181
    %v238 = vmul.f32 %v230, %v182
    %v239 = vmul.f32 %v231, %v183
    %v240 = vmul.f32 %v232, %v184
    %v241 = vmul.f32 %v233, %v185
    %v242 = vmul.f32 %v234, %v186
    %v243 = vmul.f32 %v235, %v187
    %v244 = vlaneseq
    %v245 = vshrl.u32 %v244, 7
    %v246 = vlaneseq
    %v247 = vand.u32 %v246, 127
    %v248 = vadd.s32 %v247, 128
    %v249 = vadd.s32 %v247, 256
    %v250 = vadd.s32 %v247, 384
    %v251 = vadd.s32 %v247, 512
    %v252 = vadd.s32 %v247, 640
    %v253 = vadd.s32 %v247, 768
    %v254 = vadd.s32 %v247, 896
    %s255 = smul.u32 0, 8
    %v256 = vstv %s255
    %v257 = vadd.s32 %v256, %v245
    %v258 = vmul.u32 %v257, 1024
    %v259 = vadd.s32 %v258, %v247
    %v260 = vadd.s32 %v258, %v248
    %v261 = vadd.s32 %v258, %v249
    %v262 = vadd.s32 %v258, %v250
    %v263 = vadd.s32 %v258, %v251
    %v264 = vadd.s32 %v258, %v252
    %v265 = vadd.s32 %v258, %v253
    %v266 = vadd.s32 %v258, %v254
    %vm267 = vcmp.lt.s32.totalorder %v259, 4096
    %vm268 = vcmp.lt.s32.totalorder %v260, 4096
    %vm269 = vcmp.lt.s32.totalorder %v261, 4096
    %vm270 = vcmp.lt.s32.totalorder %v262, 4096
    %vm271 = vcmp.lt.s32.totalorder %v263, 4096
    %vm272 = vcmp.lt.s32.totalorder %v264, 4096
    %vm273 = vcmp.lt.s32.totalorder %v265, 4096
    %vm274 = vcmp.lt.s32.totalorder %v266, 4096
    %v275 = vsel %vm267, %v236, 0.0
    %v276 = vsel %vm268, %v237, 0.0
    %v277 = vsel %vm269, %v238, 0.0
    %v278 = vsel %vm270, %v239, 0.0
    %v279 = vsel %vm271, %v240, 0.0
    %v280 = vsel %vm272, %v241, 0.0
    %v281 = vsel %vm273, %v242, 0.0
    %v282 = vsel %vm274, %v243, 0.0
    %v283 = vadd.f32 %v275, %v276
    %v284 = vadd.f32 %v283, %v277
    %v285 = vadd.f32 %v284, %v278
    %v286 = vadd.f32 %v285, %v279
    %v287 = vadd.f32 %v286, %v280
    %v288 = vadd.f32 %v287, %v281
    %v289 = vadd.f32 %v288, %v282
    %290 = vadd.xlane.f32.xlu0 %v289
    %v291 = vpop.xlane.xlu0 %290
    %v292 = vrot.slane %v291, 4
    %v293 = vadd.f32 %v291, %v292
    %v294 = vrot.slane %v293, 2
    %v295 = vadd.f32 %v293, %v294
    %v296 = vrot.slane %v295, 1
    %v297 = vadd.f32 %v295, %v296
    %s298 = vtos %v297
    %v299 = vstv %s298
    %300 = vst [vmem:[#allocation7] sm:$0xff] %v299
    // Predicated region
    $region18: #{tpu_custom_call.1} parent=1 // pred_check
      _
    $region19: #{tpu_custom_call.1} parent=1 // pred_check_branch
      %302 = sbr.rel (0) target = $region21
    $region20: #{tpu_custom_call.1} parent=1 // pred_region
      %s304 = ssub.s32 128, 128
      %305 = vsyncadd [#allocation4], %s304
      %s307 = sshll.u32 [#allocation7], 4
      %s308 = int_to_ptr.vmem [resolvable:$true] %s307
      %310 = dma.vmem_to_hbm [thread:$0]  %s308, 128, %s2, [#allocation4]
    $region21: #{tpu_custom_call.1} parent=1 // pred_fallthru
      _
    // Predicated region
    $region22: #{tpu_custom_call.1} parent=1 // pred_check
      _
    $region23: #{tpu_custom_call.1} parent=1 // pred_check_branch
      %312 = sbr.rel (0) target = $region25
    $region24: #{tpu_custom_call.1} parent=1 // pred_region
      %313 = dma.done [#allocation4], 128
    $region25: #{tpu_custom_call.1} parent=1 // pred_fallthru
      _
    %314 = vsyncpa [#allocation3], 1
    %315 = vsyncpa [#allocation6], 1
    %316 = vsyncpa [#allocation4], 1

</llo_original>
